<compile_context>
chip_gen: v6e
topology: v6e:2x2x1
jax: 0.10.0
libtpu: 0.0.40
codegen_flags: <defaults>
</compile_context>

<pallas_src>
import functools
import math

import jax
import jax.numpy as jnp
import numpy as np
from jax.experimental import pallas as pl
from jax.experimental.pallas import tpu as pltpu


# ------------------------------------------------------------------
# Pallas kernel: fused QKV projection + per-head masked-exp attention
# ------------------------------------------------------------------

def _mha_kernel(h_ref, w_ref, *rest, num_heads, out_dim, use_bias):
    if use_bias:
        b_ref, adj_ref, out_ref = rest
    else:
        adj_ref, out_ref = rest

    h = h_ref[...]                                                   # [N, in_dim]
    # One wide projection matmul (Wq already carries the 1/sqrt(D) scale).
    qkv = jnp.dot(h, w_ref[...], preferred_element_type=jnp.float32)  # [N, 3*H*D]
    if use_bias:
        qkv = qkv + b_ref[...]                                       # [1, 3*H*D] bcast

    hd = num_heads * out_dim
    q = qkv[:, 0 * hd:1 * hd]        # 128-lane-aligned slices: vreg aligned, free
    k = qkv[:, 1 * hd:2 * hd]
    v = qkv[:, 2 * hd:3 * hd]

    kt = k.T                          # ONE [N,H*D] -> [H*D,N] transpose for all heads
    adj_mask = adj_ref[...] != 0      # int8 mask -> bool, [N, N]

    # Static head loop: H=4 is tiny, so vreg live ranges stay bounded.
    # (If H/D grow, convert to a grid axis / fori_loop per review item 11.)
    for head in range(num_heads):
        lo = head * out_dim
        qh = q[:, lo:lo + out_dim]                                   # [N, D]
        kth = kt[lo:lo + out_dim, :]                                 # [D, N] (sublane slice)
        vh = v[:, lo:lo + out_dim]                                   # [N, D]

        # scores[v, u] = (Q_h[v] . K_h[u]) / sqrt(D)  (scale folded into Wq)
        s = jnp.dot(qh, kth, preferred_element_type=jnp.float32)     # [N, N]
        p = jnp.where(adj_mask, jnp.exp(jnp.clip(s, -5.0, 5.0)), 0.0)

        wv = jnp.dot(p, vh, preferred_element_type=jnp.float32)      # [N, D]
        z = jnp.sum(p, axis=-1, keepdims=True)                       # [N, 1]

        # EUP reciprocal; zero-in-degree rows masked on the reciprocal so no
        # 0/0 NaN is ever formed.
        inv = jnp.where(z == 0.0, 0.0, pl.reciprocal(z, approx=True))
        out_ref[:, lo:lo + out_dim] = (wv * inv).astype(out_ref.dtype)


def prepare_params(params, *, out_dim, use_bias):
    """One-time (parameter-creation-time) folding:
       - concat Wq|Wk|Wv into a single [in_dim, 3*H*D] weight
       - fold the 1/sqrt(out_dim) score scale into Wq (and bq)."""
    inv_scale = 1.0 / math.sqrt(out_dim)
    w = jnp.concatenate(
        [params["wq"] * inv_scale, params["wk"], params["wv"]], axis=1
    ).astype(jnp.float32)
    fused = {"w_qkv": w}
    if use_bias:
        b = jnp.concatenate(
            [params["bq"] * inv_scale, params["bk"], params["bv"]]
        ).astype(jnp.float32)
        fused["b_qkv"] = b.reshape(1, -1)
    return fused


def mha_forward(fused, h, adj_i8, *, num_heads, out_dim, use_bias=True):
    """h: [N, in_dim] f32.  adj_i8: [N, N] int8, adj[v, u] != 0 iff edge u -> v."""
    n, in_dim = h.shape
    hd = num_heads * out_dim

    in_specs = [
        pl.BlockSpec((n, in_dim), lambda i: (0, 0)),          # h
        pl.BlockSpec((in_dim, 3 * hd), lambda i: (0, 0)),     # fused W_qkv
    ]
    inputs = [h, fused["w_qkv"]]
    if use_bias:
        in_specs.append(pl.BlockSpec((1, 3 * hd), lambda i: (0, 0)))  # fused bias
        inputs.append(fused["b_qkv"])
    in_specs.append(pl.BlockSpec((n, n), lambda i: (0, 0)))   # int8 adjacency
    inputs.append(adj_i8)

    out = pl.pallas_call(
        functools.partial(_mha_kernel, num_heads=num_heads, out_dim=out_dim,
                          use_bias=use_bias),
        out_shape=jax.ShapeDtypeStruct((n, hd), jnp.float32),
        grid=(1,),
        in_specs=in_specs,
        out_specs=pl.BlockSpec((n, hd), lambda i: (0, 0)),
        compiler_params=pltpu.CompilerParams(
            dimension_semantics=("parallel",)),
    )(*inputs)

    # Free reshape outside the kernel; kernel stores one lane-dense (N, H*D) block.
    return out.reshape(n, num_heads, out_dim)


# ------------------------------------------------------------------
# Pure-JAX reference (edge-list scatter-add, mirrors DGL semantics)
# ------------------------------------------------------------------

def ref_forward(params, h, src, dst, *, num_heads, out_dim, use_bias=True):
    n = h.shape[0]
    q = h @ params["wq"]
    k = h @ params["wk"]
    v = h @ params["wv"]
    if use_bias:
        q = q + params["bq"]
        k = k + params["bk"]
        v = v + params["bv"]
    qh = q.reshape(n, num_heads, out_dim)
    kh = k.reshape(n, num_heads, out_dim)
    vh = v.reshape(n, num_heads, out_dim)

    # per-edge: score = exp(clip((K_h[src] . Q_h[dst]) / sqrt(D), -5, 5))
    score = (kh[src] * qh[dst]).sum(-1)                              # [E, H]
    score = jnp.exp(jnp.clip(score / math.sqrt(out_dim), -5.0, 5.0))

    wv = jnp.zeros((n, num_heads, out_dim), jnp.float32).at[dst].add(
        score[:, :, None] * vh[src])
    z = jnp.zeros((n, num_heads), jnp.float32).at[dst].add(score)
    out = wv / z[:, :, None]
    return jnp.where(jnp.isnan(out), 0.0, out)                       # NaN -> 0


# ------------------------------------------------------------------
# Main
# ------------------------------------------------------------------

if __name__ == "__main__":
    N, in_dim, num_heads, out_dim = 16, 32, 4, 32   # H*D = 128 (lane-dense output)
    use_bias = True

    key = jax.random.PRNGKey(0)
    k_h, k_adj, kq, kk, kv, kbq, kbk, kbv = jax.random.split(key, 8)

    bound = 1.0 / math.sqrt(in_dim)                 # PyTorch nn.Linear init bound
    hd_total = num_heads * out_dim
    params = {
        "wq": jax.random.uniform(kq, (in_dim, hd_total), jnp.float32, -bound, bound),
        "wk": jax.random.uniform(kk, (in_dim, hd_total), jnp.float32, -bound, bound),
        "wv": jax.random.uniform(kv, (in_dim, hd_total), jnp.float32, -bound, bound),
        "bq": jax.random.uniform(kbq, (hd_total,), jnp.float32, -bound, bound),
        "bk": jax.random.uniform(kbk, (hd_total,), jnp.float32, -bound, bound),
        "bv": jax.random.uniform(kbv, (hd_total,), jnp.float32, -bound, bound),
    }

    h = jax.random.normal(k_h, (N, in_dim), jnp.float32)

    # Random directed graph. adj[v, u] != 0 means edge u -> v.
    # np.array(...) (not np.asarray) to get a WRITABLE copy of the jax buffer.
    mask = np.array(jax.random.bernoulli(k_adj, 0.35, (N, N)), dtype=bool)
    mask[0, :] = False      # node 0 gets no incoming edges -> exercises NaN->0 path
    adj_i8 = jnp.asarray(mask, jnp.int8)            # int8 mask: 4x less DMA than f32
    dst_idx, src_idx = np.nonzero(mask)
    src = jnp.asarray(src_idx, jnp.int32)
    dst = jnp.asarray(dst_idx, jnp.int32)

    fused = prepare_params(params, out_dim=out_dim, use_bias=use_bias)
    out = mha_forward(fused, h, adj_i8, num_heads=num_heads, out_dim=out_dim,
                      use_bias=use_bias)
    jax.block_until_ready(out)

    ref = ref_forward(params, h, src, dst, num_heads=num_heads, out_dim=out_dim,
                      use_bias=use_bias)
    jax.block_until_ready(ref)

    assert out.shape == (N, num_heads, out_dim), out.shape
    # Tolerance covers the EUP approximate reciprocal used for the z normalization.
    np.testing.assert_allclose(np.asarray(out), np.asarray(ref),
                               rtol=1e-2, atol=1e-3)
    print("KERNEL_OK")
</pallas_src>

<mosaic_0001>
module attributes {stable_mosaic.version = 11 : i64} {
  func.func @_mha_kernel(%arg0: i32, %arg1: memref<16x32xf32, #tpu.memory_space<vmem>>, %arg2: memref<32x384xf32, #tpu.memory_space<vmem>>, %arg3: memref<1x384xf32, #tpu.memory_space<vmem>>, %arg4: memref<16x16xi8, #tpu.memory_space<vmem>>, %arg5: memref<16x128xf32, #tpu.memory_space<vmem>>) attributes {dimension_semantics = [#tpu.dimension_semantics<parallel>], iteration_bounds = array<i64: 1>, scalar_prefetch = 0 : i64, scratch_operands = 0 : i64, tpu.core_type = #tpu.core_type<tc>, window_params = [{pipeline_mode = #tpu.pipeline_mode<synchronous>, transform_indices = @transform_0, window_bounds = array<i64: 16, 32>}, {pipeline_mode = #tpu.pipeline_mode<synchronous>, transform_indices = @transform_1, window_bounds = array<i64: 32, 384>}, {pipeline_mode = #tpu.pipeline_mode<synchronous>, transform_indices = @transform_2, window_bounds = array<i64: 1, 384>}, {pipeline_mode = #tpu.pipeline_mode<synchronous>, transform_indices = @transform_3, window_bounds = array<i64: 16, 16>}, {pipeline_mode = #tpu.pipeline_mode<synchronous>, transform_indices = @transform_4, window_bounds = array<i64: 16, 128>}]} {
    %c0 = arith.constant 0 : index
    %c0_0 = arith.constant 0 : index
    %0 = vector.load %arg1[%c0, %c0_0] : memref<16x32xf32, #tpu.memory_space<vmem>>, vector<16x32xf32>
    %c0_1 = arith.constant 0 : index
    %c0_2 = arith.constant 0 : index
    %1 = vector.load %arg2[%c0_1, %c0_2] : memref<32x384xf32, #tpu.memory_space<vmem>>, vector<32x384xf32>
    %cst = arith.constant dense<0.000000e+00> : vector<16x384xf32>
    %2 = tpu.matmul %0, %1, %cst {dimension_numbers = #tpu.dot_dimension_numbers<[1], [0], [0], [1], [0, 0, 1, 1], [], []>} : vector<16x32xf32>, vector<32x384xf32>, vector<16x384xf32> -> vector<16x384xf32>
    %c0_3 = arith.constant 0 : index
    %c0_4 = arith.constant 0 : index
    %3 = vector.load %arg3[%c0_3, %c0_4] : memref<1x384xf32, #tpu.memory_space<vmem>>, vector<1x384xf32>
    %4 = vector.broadcast %3 : vector<1x384xf32> to vector<16x384xf32>
    %5 = arith.addf %2, %4 : vector<16x384xf32>
    %6 = vector.extract_strided_slice %5 {offsets = [0, 0], sizes = [16, 128], strides = [1, 1]} : vector<16x384xf32> to vector<16x128xf32>
    %7 = vector.extract_strided_slice %5 {offsets = [0, 128], sizes = [16, 128], strides = [1, 1]} : vector<16x384xf32> to vector<16x128xf32>
    %8 = vector.extract_strided_slice %5 {offsets = [0, 256], sizes = [16, 128], strides = [1, 1]} : vector<16x384xf32> to vector<16x128xf32>
    %9 = tpu.transpose %7, [1, 0] : vector<16x128xf32> -> vector<128x16xf32>
    %c0_5 = arith.constant 0 : index
    %c0_6 = arith.constant 0 : index
    %10 = vector.load %arg4[%c0_5, %c0_6] : memref<16x16xi8, #tpu.memory_space<vmem>>, vector<16x16xi8>
    %c0_i8 = arith.constant 0 : i8
    %11 = vector.broadcast %c0_i8 : i8 to vector<16x16xi8>
    %12 = arith.cmpi ne, %10, %11 : vector<16x16xi8>
    %13 = vector.extract_strided_slice %6 {offsets = [0, 0], sizes = [16, 32], strides = [1, 1]} : vector<16x128xf32> to vector<16x32xf32>
    %14 = vector.extract_strided_slice %9 {offsets = [0, 0], sizes = [32, 16], strides = [1, 1]} : vector<128x16xf32> to vector<32x16xf32>
    %15 = vector.extract_strided_slice %8 {offsets = [0, 0], sizes = [16, 32], strides = [1, 1]} : vector<16x128xf32> to vector<16x32xf32>
    %cst_7 = arith.constant dense<0.000000e+00> : vector<16x16xf32>
    %16 = tpu.matmul %13, %14, %cst_7 {dimension_numbers = #tpu.dot_dimension_numbers<[1], [0], [0], [1], [0, 0, 1, 1], [], []>} : vector<16x32xf32>, vector<32x16xf32>, vector<16x16xf32> -> vector<16x16xf32>
    %cst_8 = arith.constant -5.000000e+00 : f32
    %cst_9 = arith.constant 5.000000e+00 : f32
    %17 = vector.broadcast %cst_8 : f32 to vector<16x16xf32>
    %18 = arith.maximumf %17, %16 : vector<16x16xf32>
    %19 = vector.broadcast %cst_9 : f32 to vector<16x16xf32>
    %20 = arith.minimumf %19, %18 : vector<16x16xf32>
    %21 = math.exp %20 : vector<16x16xf32>
    %cst_10 = arith.constant 0.000000e+00 : f32
    %22 = vector.broadcast %cst_10 : f32 to vector<16x16xf32>
    %23 = arith.select %12, %21, %22 : vector<16x16xi1>, vector<16x16xf32>
    %cst_11 = arith.constant dense<0.000000e+00> : vector<16x32xf32>
    %24 = tpu.matmul %23, %15, %cst_11 {dimension_numbers = #tpu.dot_dimension_numbers<[1], [0], [0], [1], [0, 0, 1, 1], [], []>} : vector<16x16xf32>, vector<16x32xf32>, vector<16x32xf32> -> vector<16x32xf32>
    %cst_12 = arith.constant dense<0.000000e+00> : vector<16xf32>
    %25 = vector.multi_reduction <add>, %23, %cst_12 [1] : vector<16x16xf32> to vector<16xf32>
    %26 = vector.shape_cast %25 : vector<16xf32> to vector<16x1xf32>
    %cst_13 = arith.constant 0.000000e+00 : f32
    %27 = vector.broadcast %cst_13 : f32 to vector<16x1xf32>
    %28 = arith.cmpf oeq, %26, %27 : vector<16x1xf32>
    %29 = tpu.reciprocal %26 {approx = true} : vector<16x1xf32> -> vector<16x1xf32>
    %cst_14 = arith.constant 0.000000e+00 : f32
    %30 = vector.broadcast %cst_14 : f32 to vector<16x1xf32>
    %31 = arith.select %28, %30, %29 : vector<16x1xi1>, vector<16x1xf32>
    %32 = vector.broadcast %31 : vector<16x1xf32> to vector<16x32xf32>
    %33 = arith.mulf %24, %32 : vector<16x32xf32>
    %c0_15 = arith.constant 0 : index
    %c0_16 = arith.constant 0 : index
    %34 = vector.load %arg5[%c0_15, %c0_16] : memref<16x128xf32, #tpu.memory_space<vmem>>, vector<16x32xf32>
    tpu.vector_store %arg5[%c0_15, %c0_16], %33 {strides = array<i32>} : memref<16x128xf32, #tpu.memory_space<vmem>>, vector<16x32xf32>,
    %35 = vector.extract_strided_slice %6 {offsets = [0, 32], sizes = [16, 32], strides = [1, 1]} : vector<16x128xf32> to vector<16x32xf32>
    %36 = vector.extract_strided_slice %9 {offsets = [32, 0], sizes = [32, 16], strides = [1, 1]} : vector<128x16xf32> to vector<32x16xf32>
    %37 = vector.extract_strided_slice %8 {offsets = [0, 32], sizes = [16, 32], strides = [1, 1]} : vector<16x128xf32> to vector<16x32xf32>
    %cst_17 = arith.constant dense<0.000000e+00> : vector<16x16xf32>
    %38 = tpu.matmul %35, %36, %cst_17 {dimension_numbers = #tpu.dot_dimension_numbers<[1], [0], [0], [1], [0, 0, 1, 1], [], []>} : vector<16x32xf32>, vector<32x16xf32>, vector<16x16xf32> -> vector<16x16xf32>
    %cst_18 = arith.constant -5.000000e+00 : f32
    %cst_19 = arith.constant 5.000000e+00 : f32
    %39 = vector.broadcast %cst_18 : f32 to vector<16x16xf32>
    %40 = arith.maximumf %39, %38 : vector<16x16xf32>
    %41 = vector.broadcast %cst_19 : f32 to vector<16x16xf32>
    %42 = arith.minimumf %41, %40 : vector<16x16xf32>
    %43 = math.exp %42 : vector<16x16xf32>
    %cst_20 = arith.constant 0.000000e+00 : f32
    %44 = vector.broadcast %cst_20 : f32 to vector<16x16xf32>
    %45 = arith.select %12, %43, %44 : vector<16x16xi1>, vector<16x16xf32>
    %cst_21 = arith.constant dense<0.000000e+00> : vector<16x32xf32>
    %46 = tpu.matmul %45, %37, %cst_21 {dimension_numbers = #tpu.dot_dimension_numbers<[1], [0], [0], [1], [0, 0, 1, 1], [], []>} : vector<16x16xf32>, vector<16x32xf32>, vector<16x32xf32> -> vector<16x32xf32>
    %cst_22 = arith.constant dense<0.000000e+00> : vector<16xf32>
    %47 = vector.multi_reduction <add>, %45, %cst_22 [1] : vector<16x16xf32> to vector<16xf32>
    %48 = vector.shape_cast %47 : vector<16xf32> to vector<16x1xf32>
    %cst_23 = arith.constant 0.000000e+00 : f32
    %49 = vector.broadcast %cst_23 : f32 to vector<16x1xf32>
    %50 = arith.cmpf oeq, %48, %49 : vector<16x1xf32>
    %51 = tpu.reciprocal %48 {approx = true} : vector<16x1xf32> -> vector<16x1xf32>
    %cst_24 = arith.constant 0.000000e+00 : f32
    %52 = vector.broadcast %cst_24 : f32 to vector<16x1xf32>
    %53 = arith.select %50, %52, %51 : vector<16x1xi1>, vector<16x1xf32>
    %54 = vector.broadcast %53 : vector<16x1xf32> to vector<16x32xf32>
    %55 = arith.mulf %46, %54 : vector<16x32xf32>
    %c0_25 = arith.constant 0 : index
    %c32 = arith.constant 32 : index
    %56 = vector.load %arg5[%c0_25, %c32] : memref<16x128xf32, #tpu.memory_space<vmem>>, vector<16x32xf32>
    tpu.vector_store %arg5[%c0_25, %c32], %55 {strides = array<i32>} : memref<16x128xf32, #tpu.memory_space<vmem>>, vector<16x32xf32>,
    %57 = vector.extract_strided_slice %6 {offsets = [0, 64], sizes = [16, 32], strides = [1, 1]} : vector<16x128xf32> to vector<16x32xf32>
    %58 = vector.extract_strided_slice %9 {offsets = [64, 0], sizes = [32, 16], strides = [1, 1]} : vector<128x16xf32> to vector<32x16xf32>
    %59 = vector.extract_strided_slice %8 {offsets = [0, 64], sizes = [16, 32], strides = [1, 1]} : vector<16x128xf32> to vector<16x32xf32>
    %cst_26 = arith.constant dense<0.000000e+00> : vector<16x16xf32>
    %60 = tpu.matmul %57, %58, %cst_26 {dimension_numbers = #tpu.dot_dimension_numbers<[1], [0], [0], [1], [0, 0, 1, 1], [], []>} : vector<16x32xf32>, vector<32x16xf32>, vector<16x16xf32> -> vector<16x16xf32>
    %cst_27 = arith.constant -5.000000e+00 : f32
    %cst_28 = arith.constant 5.000000e+00 : f32
    %61 = vector.broadcast %cst_27 : f32 to vector<16x16xf32>
    %62 = arith.maximumf %61, %60 : vector<16x16xf32>
    %63 = vector.broadcast %cst_28 : f32 to vector<16x16xf32>
    %64 = arith.minimumf %63, %62 : vector<16x16xf32>
    %65 = math.exp %64 : vector<16x16xf32>
    %cst_29 = arith.constant 0.000000e+00 : f32
    %66 = vector.broadcast %cst_29 : f32 to vector<16x16xf32>
    %67 = arith.select %12, %65, %66 : vector<16x16xi1>, vector<16x16xf32>
    %cst_30 = arith.constant dense<0.000000e+00> : vector<16x32xf32>
    %68 = tpu.matmul %67, %59, %cst_30 {dimension_numbers = #tpu.dot_dimension_numbers<[1], [0], [0], [1], [0, 0, 1, 1], [], []>} : vector<16x16xf32>, vector<16x32xf32>, vector<16x32xf32> -> vector<16x32xf32>
    %cst_31 = arith.constant dense<0.000000e+00> : vector<16xf32>
    %69 = vector.multi_reduction <add>, %67, %cst_31 [1] : vector<16x16xf32> to vector<16xf32>
    %70 = vector.shape_cast %69 : vector<16xf32> to vector<16x1xf32>
    %cst_32 = arith.constant 0.000000e+00 : f32
    %71 = vector.broadcast %cst_32 : f32 to vector<16x1xf32>
    %72 = arith.cmpf oeq, %70, %71 : vector<16x1xf32>
    %73 = tpu.reciprocal %70 {approx = true} : vector<16x1xf32> -> vector<16x1xf32>
    %cst_33 = arith.constant 0.000000e+00 : f32
    %74 = vector.broadcast %cst_33 : f32 to vector<16x1xf32>
    %75 = arith.select %72, %74, %73 : vector<16x1xi1>, vector<16x1xf32>
    %76 = vector.broadcast %75 : vector<16x1xf32> to vector<16x32xf32>
    %77 = arith.mulf %68, %76 : vector<16x32xf32>
    %c0_34 = arith.constant 0 : index
    %c64 = arith.constant 64 : index
    %78 = vector.load %arg5[%c0_34, %c64] : memref<16x128xf32, #tpu.memory_space<vmem>>, vector<16x32xf32>
    tpu.vector_store %arg5[%c0_34, %c64], %77 {strides = array<i32>} : memref<16x128xf32, #tpu.memory_space<vmem>>, vector<16x32xf32>,
    %79 = vector.extract_strided_slice %6 {offsets = [0, 96], sizes = [16, 32], strides = [1, 1]} : vector<16x128xf32> to vector<16x32xf32>
    %80 = vector.extract_strided_slice %9 {offsets = [96, 0], sizes = [32, 16], strides = [1, 1]} : vector<128x16xf32> to vector<32x16xf32>
    %81 = vector.extract_strided_slice %8 {offsets = [0, 96], sizes = [16, 32], strides = [1, 1]} : vector<16x128xf32> to vector<16x32xf32>
    %cst_35 = arith.constant dense<0.000000e+00> : vector<16x16xf32>
    %82 = tpu.matmul %79, %80, %cst_35 {dimension_numbers = #tpu.dot_dimension_numbers<[1], [0], [0], [1], [0, 0, 1, 1], [], []>} : vector<16x32xf32>, vector<32x16xf32>, vector<16x16xf32> -> vector<16x16xf32>
    %cst_36 = arith.constant -5.000000e+00 : f32
    %cst_37 = arith.constant 5.000000e+00 : f32
    %83 = vector.broadcast %cst_36 : f32 to vector<16x16xf32>
    %84 = arith.maximumf %83, %82 : vector<16x16xf32>
    %85 = vector.broadcast %cst_37 : f32 to vector<16x16xf32>
    %86 = arith.minimumf %85, %84 : vector<16x16xf32>
    %87 = math.exp %86 : vector<16x16xf32>
    %cst_38 = arith.constant 0.000000e+00 : f32
    %88 = vector.broadcast %cst_38 : f32 to vector<16x16xf32>
    %89 = arith.select %12, %87, %88 : vector<16x16xi1>, vector<16x16xf32>
    %cst_39 = arith.constant dense<0.000000e+00> : vector<16x32xf32>
    %90 = tpu.matmul %89, %81, %cst_39 {dimension_numbers = #tpu.dot_dimension_numbers<[1], [0], [0], [1], [0, 0, 1, 1], [], []>} : vector<16x16xf32>, vector<16x32xf32>, vector<16x32xf32> -> vector<16x32xf32>
    %cst_40 = arith.constant dense<0.000000e+00> : vector<16xf32>
    %91 = vector.multi_reduction <add>, %89, %cst_40 [1] : vector<16x16xf32> to vector<16xf32>
    %92 = vector.shape_cast %91 : vector<16xf32> to vector<16x1xf32>
    %cst_41 = arith.constant 0.000000e+00 : f32
    %93 = vector.broadcast %cst_41 : f32 to vector<16x1xf32>
    %94 = arith.cmpf oeq, %92, %93 : vector<16x1xf32>
    %95 = tpu.reciprocal %92 {approx = true} : vector<16x1xf32> -> vector<16x1xf32>
    %cst_42 = arith.constant 0.000000e+00 : f32
    %96 = vector.broadcast %cst_42 : f32 to vector<16x1xf32>
    %97 = arith.select %94, %96, %95 : vector<16x1xi1>, vector<16x1xf32>
    %98 = vector.broadcast %97 : vector<16x1xf32> to vector<16x32xf32>
    %99 = arith.mulf %90, %98 : vector<16x32xf32>
    %c0_43 = arith.constant 0 : index
    %c96 = arith.constant 96 : index
    %100 = vector.load %arg5[%c0_43, %c96] : memref<16x128xf32, #tpu.memory_space<vmem>>, vector<16x32xf32>
    tpu.vector_store %arg5[%c0_43, %c96], %99 {strides = array<i32>} : memref<16x128xf32, #tpu.memory_space<vmem>>, vector<16x32xf32>,
    return
  }
  func.func @transform_0(%arg0: i32) -> (i32, i32) {
    %c0_i32 = arith.constant 0 : i32
    %c0_i32_0 = arith.constant 0 : i32
    %c0_i32_1 = arith.constant 0 : i32
    return %c0_i32, %c0_i32_0 : i32, i32
  }
  func.func @transform_1(%arg0: i32) -> (i32, i32) {
    %c0_i32 = arith.constant 0 : i32
    %c0_i32_0 = arith.constant 0 : i32
    %c0_i32_1 = arith.constant 0 : i32
    return %c0_i32, %c0_i32_0 : i32, i32
  }
  func.func @transform_2(%arg0: i32) -> (i32, i32) {
    %c0_i32 = arith.constant 0 : i32
    %c0_i32_0 = arith.constant 0 : i32
    %c0_i32_1 = arith.constant 0 : i32
    return %c0_i32, %c0_i32_0 : i32, i32
  }
  func.func @transform_3(%arg0: i32) -> (i32, i32) {
    %c0_i32 = arith.constant 0 : i32
    %c0_i32_0 = arith.constant 0 : i32
    %c0_i32_1 = arith.constant 0 : i32
    return %c0_i32, %c0_i32_0 : i32, i32
  }
  func.func @transform_4(%arg0: i32) -> (i32, i32) {
    %c0_i32 = arith.constant 0 : i32
    %c0_i32_0 = arith.constant 0 : i32
    %c0_i32_1 = arith.constant 0 : i32
    return %c0_i32, %c0_i32_0 : i32, i32
  }
}

</mosaic_0001>

<llo_original>
// kernel: tpu_custom_call.1
$region0: #{tpu_custom_call.1}
  #allocation0 [shape = 'u32[]', space=smem, size = 0x4, offset = 0x4, fixed_abs, tag = 'smem constant byte address 0x4 - core index']
  #allocation1 [shape = 'u32[144,128]{1,0:T(1,128)}', space=vmem, size = 0x12000, scoped, tag = 'internal scratch']
  %s0 = inlined_call_operand.hbm [shape: f32[16,32], index: 0, kind: input, shape index: {}]
  %s1 = inlined_call_operand.hbm [shape: f32[32,384], index: 1, kind: input, shape index: {}]
  %s2 = inlined_call_operand.hbm [shape: f32[1,384], index: 2, kind: input, shape index: {}]
  %s3 = inlined_call_operand.vmem [shape: s8[16,16], index: 3, kind: input, shape index: {}]
  %s4 = inlined_call_operand.hbm [shape: f32[16,128], index: 4, kind: output, shape index: {}]
  %s5 = sld [smem:[#allocation0]]
  $region38: #{tpu_custom_call.1} parent=0
    _
  %s7 = ssub.s32 1, %s5
  %s8 = scalar_select 0, %s7, %s5
  $region1: #{tpu_custom_call.1} parent=0
    #allocation2 [shape = 'u8[8192]{0}', space=vmem, size = 0x2000, scoped, tag = 'input window, operand 0, single buffered']
    #allocation3 [shape = 's32[1]{0}', space=sflag, size = 0x4, scoped, tag = 'scoped memory for tpu_custom_call.1']
    #allocation4 [shape = 's32[1]{0}', space=sflag, size = 0x4, scoped, tag = 'scoped memory for tpu_custom_call.1']
    #allocation5 [shape = 'u8[49152]{0}', space=vmem, size = 0xc000, scoped, tag = 'input window, operand 1, single buffered']
    #allocation6 [shape = 's32[1]{0}', space=sflag, size = 0x4, scoped, tag = 'scoped memory for tpu_custom_call.1']
    #allocation7 [shape = 'u8[1536]{0}', space=vmem, size = 0x800, scoped, tag = 'input window, operand 2, single buffered']
    #allocation8 [shape = 'u8[8192]{0}', space=vmem, size = 0x2000, scoped, tag = 'output window, operand 0, single buffered']
    %9 = vsyncpa [#allocation3], 0
    %10 = vsyncpa [#allocation6], 0
    %11 = vsyncpa [#allocation4], 0
    // Predicated region
    $region2: #{tpu_custom_call.1} parent=1 // pred_check
      _
    $region3: #{tpu_custom_call.1} parent=1 // pred_check_branch
      %13 = sbr.rel (0) target = $region5
    $region4: #{tpu_custom_call.1} parent=1 // pred_region
      %s15 = ssub.s32 256, 256
      %16 = vsyncadd [#allocation3], %s15
      %s17 = sshll.u32 [#allocation2], 4
      %s18 = int_to_ptr.vmem [resolvable:$true] %s17
      %23 = dma.hbm_to_vmem [thread:$0]  %s0, 256, %s18, [#allocation3], 128, 128, 8
    $region5: #{tpu_custom_call.1} parent=1 // pred_fallthru
      _
    // Predicated region
    $region6: #{tpu_custom_call.1} parent=1 // pred_check
      _
    $region7: #{tpu_custom_call.1} parent=1 // pred_check_branch
      %25 = sbr.rel (0) target = $region9
    $region8: #{tpu_custom_call.1} parent=1 // pred_region
      %s27 = ssub.s32 1536, 1536
      %28 = vsyncadd [#allocation6], %s27
      %s29 = sshll.u32 [#allocation5], 4
      %s30 = int_to_ptr.vmem [resolvable:$true] %s29
      %35 = dma.hbm_to_vmem [thread:$0]  %s1, 1536, %s30, [#allocation6], 384, 384, 24
    $region9: #{tpu_custom_call.1} parent=1 // pred_fallthru
      _
    // Predicated region
    $region10: #{tpu_custom_call.1} parent=1 // pred_check
      _
    $region11: #{tpu_custom_call.1} parent=1 // pred_check_branch
      %37 = sbr.rel (0) target = $region13
    $region12: #{tpu_custom_call.1} parent=1 // pred_region
      %s39 = ssub.s32 48, 48
      %40 = vsyncadd [#allocation6], %s39
      %s42 = sshll.u32 [#allocation7], 4
      %s43 = int_to_ptr.vmem [resolvable:$true] %s42
      %45 = dma.hbm_to_vmem [thread:$0]  %s2, 48, %s43, [#allocation6]
    $region13: #{tpu_custom_call.1} parent=1 // pred_fallthru
      _
    // Predicated region
    $region14: #{tpu_custom_call.1} parent=1 // pred_check
      _
    $region15: #{tpu_custom_call.1} parent=1 // pred_check_branch
      %47 = sbr.rel (0) target = $region17
    $region16: #{tpu_custom_call.1} parent=1 // pred_region
      _
    $region17: #{tpu_custom_call.1} parent=1 // pred_fallthru
      _
    // Predicated region
    $region18: #{tpu_custom_call.1} parent=1 // pred_check
      _
    $region19: #{tpu_custom_call.1} parent=1 // pred_check_branch
      %49 = sbr.rel (0) target = $region21
    $region20: #{tpu_custom_call.1} parent=1 // pred_region
      %50 = dma.done [#allocation3], 256
    $region21: #{tpu_custom_call.1} parent=1 // pred_fallthru
      _
    // Predicated region
    $region22: #{tpu_custom_call.1} parent=1 // pred_check
      _
    $region23: #{tpu_custom_call.1} parent=1 // pred_check_branch
      %52 = sbr.rel (0) target = $region25
    $region24: #{tpu_custom_call.1} parent=1 // pred_region
      %53 = dma.done [#allocation6], 1536
    $region25: #{tpu_custom_call.1} parent=1 // pred_fallthru
      _
    // Predicated region
    $region26: #{tpu_custom_call.1} parent=1 // pred_check
      _
    $region27: #{tpu_custom_call.1} parent=1 // pred_check_branch
      %55 = sbr.rel (0) target = $region29
    $region28: #{tpu_custom_call.1} parent=1 // pred_region
      %56 = dma.done [#allocation6], 48
    $region29: #{tpu_custom_call.1} parent=1 // pred_fallthru
      _
    %v59 = vld [vmem:[#allocation2] sm:$0xff]
    %v60 = vld [vmem:[#allocation2 + $0x8] sm:$0xff]
    %v61 = vld [vmem:[#allocation5] sm:$0xff]
    %v62 = vld [vmem:[#allocation5 + $0x8] sm:$0xff]
    %v63 = vld [vmem:[#allocation5 + $0x10] sm:$0xff]
    %v64 = vld [vmem:[#allocation5 + $0x18] sm:$0xff]
    %v65 = vld [vmem:[#allocation5 + $0x20] sm:$0xff]
    %v66 = vld [vmem:[#allocation5 + $0x28] sm:$0xff]
    %v67 = vld [vmem:[#allocation5 + $0x30] sm:$0xff]
    %v68 = vld [vmem:[#allocation5 + $0x38] sm:$0xff]
    %v69 = vld [vmem:[#allocation5 + $0x40] sm:$0xff]
    %v70 = vld [vmem:[#allocation5 + $0x48] sm:$0xff]
    %v71 = vld [vmem:[#allocation5 + $0x50] sm:$0xff]
    %v72 = vld [vmem:[#allocation5 + $0x58] sm:$0xff]
    %v73 = vld [vmem:[#allocation7] sm:$0x7]
    %v75 = vlaneseq
    %v76 = vshrl.u32 %v75, 7
    %v77 = vsub.s32 0, %v76
    %v78 = vrot.slane %v73, %v77
    %v79 = vlaneseq
    %v80 = vshrl.u32 %v79, 7
    %v81 = vsub.s32 1, %v80
    %v82 = vrot.slane %v73, %v81
    %v83 = vlaneseq
    %v84 = vshrl.u32 %v83, 7
    %v85 = vsub.s32 2, %v84
    %v86 = vrot.slane %v73, %v85
    %vm90 = vcmask 261120
    %v92 = vsel %vm90, %v59, 0
    %v95 = vsel %vm90, %v60, 0
    %97 = vmatprep.subr.mxu0 0.0
    %98 = vmatpush1.msra.mxu0 0.0
    %99 = vmatprep.subr.mxu0 0.0
    %100 = vmatpush1.msra.mxu0 0.0
    %101 = vmatprep.subr.mxu0 0.0
    %102 = vmatpush1.msra.mxu0 0.0
    %103 = vmatprep.subr.mxu0 0.0
    %104 = vmatpush1.msra.mxu0 0.0
    %105 = vmatprep.subr.mxu0 0.0
    %106 = vmatpush1.msra.mxu0 0.0
    %107 = vmatprep.subr.mxu0 0.0
    %108 = vmatpush1.msra.mxu0 0.0
    %109 = vmatprep.subr.mxu0 0.0
    %110 = vmatpush1.msra.mxu0 0.0
    %111 = vmatprep.subr.mxu0 0.0
    %112 = vmatpush1.msra.mxu0 0.0
    %113 = vmatprep.subr.mxu0 0.0
    %114 = vmatpush1.msra.mxu0 0.0
    %115 = vmatprep.subr.mxu0 0.0
    %116 = vmatpush1.msra.mxu0 0.0
    %117 = vmatprep.subr.mxu0 0.0
    %118 = vmatpush1.msra.mxu0 0.0
    %119 = vmatprep.subr.mxu0 0.0
    %120 = vmatpush1.msra.mxu0 0.0
    %121 = vmatprep.subr.mxu0 %v71
    %122 = vmatpush1.msra.mxu0 %v70
    %123 = vmatprep.subr.mxu0 %v68
    %124 = vmatpush1.msra.mxu0 %v67
    %125 = vmatprep.subr.mxu0 %v65
    %126 = vmatpush1.msra.mxu0 %v64
    %127 = vmatprep.subr.mxu0 %v62
    %128 = vmatpush1.msra.mxu0 %v61
    %129 = vmatprep.subr.mxu0 0.0
    %130 = vmatpush2.msra.mxu0 0.0
    %131 = vmatprep.subr.mxu0 0.0
    %132 = vmatpush2.msra.mxu0 0.0
    %133 = vmatprep.subr.mxu0 0.0
    %134 = vmatpush2.msra.mxu0 0.0
    %135 = vmatprep.subr.mxu0 0.0
    %136 = vmatpush2.msra.mxu0 0.0
    %137 = vmatprep.subr.mxu0 0.0
    %138 = vmatpush2.msra.mxu0 0.0
    %139 = vmatprep.subr.mxu0 0.0
    %140 = vmatpush2.msra.mxu0 0.0
    %141 = vmatprep.subr.mxu0 0.0
    %142 = vmatpush2.msra.mxu0 0.0
    %143 = vmatprep.subr.mxu0 0.0
    %144 = vmatpush2.msra.mxu0 0.0
    %145 = vmatprep.subr.mxu0 0.0
    %146 = vmatpush2.msra.mxu0 0.0
    %147 = vmatprep.subr.mxu0 0.0
    %148 = vmatpush2.msra.mxu0 0.0
    %149 = vmatprep.subr.mxu0 0.0
    %150 = vmatpush2.msra.mxu0 0.0
    %151 = vmatprep.subr.mxu0 0.0
    %152 = vmatpush2.msra.mxu0 0.0
    %153 = vmatprep.subr.mxu0 0.0
    %154 = vmatpush2.msra.mxu0 0.0
    %155 = vmatprep.subr.mxu0 0.0
    %156 = vmatpush2.msra.mxu0 0.0
    %157 = vmatprep.subr.mxu0 0.0
    %158 = vmatpush2.msra.mxu0 0.0
    %159 = vmatprep.subr.mxu0 0.0
    %160 = vmatpush2.msra.mxu0 0.0
    %161 = vmatprep.mubr.f32.mxu0 0.0
    %162 = vmatmul.mubr.f32.gmra.mxu0 %v92
    %v163 = vpop.f32.mrf.mxu0
    %v164 = vadd.f32 %v78, %v163
    %v165 = vpop.f32.mrf.mxu0
    %v166 = vadd.f32 %v82, %v165
    %167 = vmatprep.mubr.f32.mxu0 0.0
    %168 = vmatmul.mubr.f32.gmra.mxu0 %v95
    %v169 = vpop.f32.mrf.mxu0
    %v170 = vadd.f32 %v78, %v169
    %v171 = vpop.f32.mrf.mxu0
    %v172 = vadd.f32 %v82, %v171
    %173 = vdwg.mxu0
    %174 = vmatprep.subr.mxu0 0.0
    %175 = vmatpush1.msra.mxu0 0.0
    %176 = vmatprep.subr.mxu0 0.0
    %177 = vmatpush1.msra.mxu0 0.0
    %178 = vmatprep.subr.mxu0 0.0
    %179 = vmatpush1.msra.mxu0 0.0
    %180 = vmatprep.subr.mxu0 0.0
    %181 = vmatpush1.msra.mxu0 0.0
    %182 = vmatprep.subr.mxu0 0.0
    %183 = vmatpush1.msra.mxu0 0.0
    %184 = vmatprep.subr.mxu0 0.0
    %185 = vmatpush1.msra.mxu0 0.0
    %186 = vmatprep.subr.mxu0 0.0
    %187 = vmatpush1.msra.mxu0 0.0
    %188 = vmatprep.subr.mxu0 0.0
    %189 = vmatpush1.msra.mxu0 0.0
    %190 = vmatprep.subr.mxu0 0.0
    %191 = vmatpush1.msra.mxu0 0.0
    %192 = vmatprep.subr.mxu0 0.0
    %193 = vmatpush1.msra.mxu0 0.0
    %194 = vmatprep.subr.mxu0 0.0
    %195 = vmatpush1.msra.mxu0 0.0
    %196 = vmatprep.subr.mxu0 0.0
    %197 = vmatpush1.msra.mxu0 0.0
    %198 = vmatprep.subr.mxu0 0.0
    %199 = vmatpush1.msra.mxu0 %v72
    %200 = vmatprep.subr.mxu0 0.0
    %201 = vmatpush1.msra.mxu0 %v69
    %202 = vmatprep.subr.mxu0 0.0
    %203 = vmatpush1.msra.mxu0 %v66
    %204 = vmatprep.subr.mxu0 0.0
    %205 = vmatpush1.msra.mxu0 %v63
    %206 = vmatprep.subr.mxu0 0.0
    %207 = vmatpush2.msra.mxu0 0.0
    %208 = vmatprep.subr.mxu0 0.0
    %209 = vmatpush2.msra.mxu0 0.0
    %210 = vmatprep.subr.mxu0 0.0
    %211 = vmatpush2.msra.mxu0 0.0
    %212 = vmatprep.subr.mxu0 0.0
    %213 = vmatpush2.msra.mxu0 0.0
    %214 = vmatprep.subr.mxu0 0.0
    %215 = vmatpush2.msra.mxu0 0.0
    %216 = vmatprep.subr.mxu0 0.0
    %217 = vmatpush2.msra.mxu0 0.0
    %218 = vmatprep.subr.mxu0 0.0
    %219 = vmatpush2.msra.mxu0 0.0
    %220 = vmatprep.subr.mxu0 0.0
    %221 = vmatpush2.msra.mxu0 0.0
    %222 = vmatprep.subr.mxu0 0.0
    %223 = vmatpush2.msra.mxu0 0.0
    %224 = vmatprep.subr.mxu0 0.0
    %225 = vmatpush2.msra.mxu0 0.0
    %226 = vmatprep.subr.mxu0 0.0
    %227 = vmatpush2.msra.mxu0 0.0
    %228 = vmatprep.subr.mxu0 0.0
    %229 = vmatpush2.msra.mxu0 0.0
    %230 = vmatprep.subr.mxu0 0.0
    %231 = vmatpush2.msra.mxu0 0.0
    %232 = vmatprep.subr.mxu0 0.0
    %233 = vmatpush2.msra.mxu0 0.0
    %234 = vmatprep.subr.mxu0 0.0
    %235 = vmatpush2.msra.mxu0 0.0
    %236 = vmatprep.subr.mxu0 0.0
    %237 = vmatpush2.msra.mxu0 0.0
    %238 = vmatprep.mubr.f32.mxu0 0.0
    %239 = vmatmul.mubr.f32.gmra.mxu0 %v92
    %v240 = vpop.f32.mrf.mxu0
    %v241 = vadd.f32 %v86, %v240
    %v242 = vpop.f32.mrf.mxu0
    %243 = vmatprep.mubr.f32.mxu0 0.0
    %244 = vmatmul.mubr.f32.gmra.mxu0 %v95
    %v245 = vpop.f32.mrf.mxu0
    %v246 = vadd.f32 %v86, %v245
    %v247 = vpop.f32.mrf.mxu0
    %248 = vdwg.mxu0
    %v249 = vld [vmem:[%s3] sm:$0x3]
    %v250 = vld [vmem:[%s3 + $0x2] sm:$0x3]
    %vm251 = vnez %v249
    %vm252 = vnez %v250
    %v254 = vsel %vm90, %v164, 0
    %v257 = vsel %vm90, %v170, 0
    %v260 = vsel %vm90, %v166, 0
    %v263 = vsel %vm90, %v172, 0
    %265 = vmatprep.subr.mxu0 0.0
    %266 = vmatpush1.xpose.msra.mxu0 0.0
    %267 = vmatprep.subr.mxu0 0.0
    %268 = vmatpush1.xpose.msra.mxu0 0.0
    %269 = vmatprep.subr.mxu0 0.0
    %270 = vmatpush1.xpose.msra.mxu0 0.0
    %271 = vmatprep.subr.mxu0 0.0
    %272 = vmatpush1.xpose.msra.mxu0 0.0
    %273 = vmatprep.subr.mxu0 0.0
    %274 = vmatpush1.xpose.msra.mxu0 0.0
    %275 = vmatprep.subr.mxu0 0.0
    %276 = vmatpush1.xpose.msra.mxu0 0.0
    %277 = vmatprep.subr.mxu0 0.0
    %278 = vmatpush1.xpose.msra.mxu0 0.0
    %279 = vmatprep.subr.mxu0 0.0
    %280 = vmatpush1.xpose.msra.mxu0 0.0
    %281 = vmatprep.subr.mxu0 0.0
    %282 = vmatpush1.xpose.msra.mxu0 0.0
    %283 = vmatprep.subr.mxu0 0.0
    %284 = vmatpush1.xpose.msra.mxu0 0.0
    %285 = vmatprep.subr.mxu0 0.0
    %286 = vmatpush1.xpose.msra.mxu0 0.0
    %287 = vmatprep.subr.mxu0 0.0
    %288 = vmatpush1.xpose.msra.mxu0 0.0
    %289 = vmatprep.subr.mxu0 0.0
    %290 = vmatpush1.xpose.msra.mxu0 0.0
    %291 = vmatprep.subr.mxu0 0.0
    %292 = vmatpush1.xpose.msra.mxu0 0.0
    %293 = vmatprep.subr.mxu0 0.0
    %294 = vmatpush1.xpose.msra.mxu0 %v263
    %295 = vmatprep.subr.mxu0 0.0
    %296 = vmatpush1.xpose.msra.mxu0 %v260
    %297 = vmatprep.subr.mxu0 0.0
    %298 = vmatpush2.xpose.msra.mxu0 0.0
    %299 = vmatprep.subr.mxu0 0.0
    %300 = vmatpush2.xpose.msra.mxu0 0.0
    %301 = vmatprep.subr.mxu0 0.0
    %302 = vmatpush2.xpose.msra.mxu0 0.0
    %303 = vmatprep.subr.mxu0 0.0
    %304 = vmatpush2.xpose.msra.mxu0 0.0
    %305 = vmatprep.subr.mxu0 0.0
    %306 = vmatpush2.xpose.msra.mxu0 0.0
    %307 = vmatprep.subr.mxu0 0.0
    %308 = vmatpush2.xpose.msra.mxu0 0.0
    %309 = vmatprep.subr.mxu0 0.0
    %310 = vmatpush2.xpose.msra.mxu0 0.0
    %311 = vmatprep.subr.mxu0 0.0
    %312 = vmatpush2.xpose.msra.mxu0 0.0
    %313 = vmatprep.subr.mxu0 0.0
    %314 = vmatpush2.xpose.msra.mxu0 0.0
    %315 = vmatprep.subr.mxu0 0.0
    %316 = vmatpush2.xpose.msra.mxu0 0.0
    %317 = vmatprep.subr.mxu0 0.0
    %318 = vmatpush2.xpose.msra.mxu0 0.0
    %319 = vmatprep.subr.mxu0 0.0
    %320 = vmatpush2.xpose.msra.mxu0 0.0
    %321 = vmatprep.subr.mxu0 0.0
    %322 = vmatpush2.xpose.msra.mxu0 0.0
    %323 = vmatprep.subr.mxu0 0.0
    %324 = vmatpush2.xpose.msra.mxu0 0.0
    %325 = vmatprep.subr.mxu0 0.0
    %326 = vmatpush2.xpose.msra.mxu0 0.0
    %327 = vmatprep.subr.mxu0 0.0
    %328 = vmatpush2.xpose.msra.mxu0 0.0
    %329 = vmatprep.mubr.f32.mxu0 0.0
    %330 = vmatmul.mubr.f32.gmra.mxu0 %v254
    %v331 = vpop.f32.mrf.mxu0
    %v332 = vadd.f32 0.0, %v331
    %v333 = vpop.f32.mrf.mxu0
    %334 = vmatprep.mubr.f32.mxu0 0.0
    %335 = vmatmul.mubr.f32.gmra.mxu0 %v257
    %v336 = vpop.f32.mrf.mxu0
    %v337 = vadd.f32 0.0, %v336
    %v338 = vpop.f32.mrf.mxu0
    %339 = vdwg.mxu0
    %v340 = vmax.f32 %v332, -5.0
    %v341 = vmax.f32 %v337, -5.0
    %v342 = vmin.f32 %v340, 5.0
    %v343 = vmin.f32 %v341, 5.0
    %v344 = vmul.f32 %v342, 1.442695
    %v345 = vpow.pop %v344
    %v346 = vmul.f32 %v343, 1.442695
    %v347 = vpow.pop %v346
    %v348 = vsel %vm251, 16843009, 0
    %v349 = vsel %vm252, 16843009, 0
    %v350 = vunpack.c.0.s8 %v348
    %v351 = vunpack.c.0.s8 %v349
    %vm352 = vcmp.ne.s32.totalorder %v350, 0
    %vm353 = vcmp.ne.s32.totalorder %v351, 0
    %v354 = vsel %vm352, %v345, 0.0
    %v355 = vsel %vm353, %v347, 0.0
    %vm356 = vcmask 130048
    %v358 = vsel %vm356, %v354, 0
    %v361 = vsel %vm356, %v355, 0
    %363 = vmatprep.subr.mxu0 0.0
    %364 = vmatpush1.msra.mxu0 0.0
    %365 = vmatprep.subr.mxu0 0.0
    %366 = vmatpush1.msra.mxu0 0.0
    %367 = vmatprep.subr.mxu0 0.0
    %368 = vmatpush1.msra.mxu0 0.0
    %369 = vmatprep.subr.mxu0 0.0
    %370 = vmatpush1.msra.mxu0 0.0
    %371 = vmatprep.subr.mxu0 0.0
    %372 = vmatpush1.msra.mxu0 0.0
    %373 = vmatprep.subr.mxu0 0.0
    %374 = vmatpush1.msra.mxu0 0.0
    %375 = vmatprep.subr.mxu0 0.0
    %376 = vmatpush1.msra.mxu0 0.0
    %377 = vmatprep.subr.mxu0 0.0
    %378 = vmatpush1.msra.mxu0 0.0
    %379 = vmatprep.subr.mxu0 0.0
    %380 = vmatpush1.msra.mxu0 0.0
    %381 = vmatprep.subr.mxu0 0.0
    %382 = vmatpush1.msra.mxu0 0.0
    %383 = vmatprep.subr.mxu0 0.0
    %384 = vmatpush1.msra.mxu0 0.0
    %385 = vmatprep.subr.mxu0 0.0
    %386 = vmatpush1.msra.mxu0 0.0
    %387 = vmatprep.subr.mxu0 0.0
    %388 = vmatpush1.msra.mxu0 0.0
    %389 = vmatprep.subr.mxu0 0.0
    %390 = vmatpush1.msra.mxu0 0.0
    %391 = vmatprep.subr.mxu0 0.0
    %392 = vmatpush1.msra.mxu0 %v246
    %393 = vmatprep.subr.mxu0 0.0
    %394 = vmatpush1.msra.mxu0 %v241
    %395 = vmatprep.subr.mxu0 0.0
    %396 = vmatpush2.msra.mxu0 0.0
    %397 = vmatprep.subr.mxu0 0.0
    %398 = vmatpush2.msra.mxu0 0.0
    %399 = vmatprep.subr.mxu0 0.0
    %400 = vmatpush2.msra.mxu0 0.0
    %401 = vmatprep.subr.mxu0 0.0
    %402 = vmatpush2.msra.mxu0 0.0
    %403 = vmatprep.subr.mxu0 0.0
    %404 = vmatpush2.msra.mxu0 0.0
    %405 = vmatprep.subr.mxu0 0.0
    %406 = vmatpush2.msra.mxu0 0.0
    %407 = vmatprep.subr.mxu0 0.0
    %408 = vmatpush2.msra.mxu0 0.0
    %409 = vmatprep.subr.mxu0 0.0
    %410 = vmatpush2.msra.mxu0 0.0
    %411 = vmatprep.subr.mxu0 0.0
    %412 = vmatpush2.msra.mxu0 0.0
    %413 = vmatprep.subr.mxu0 0.0
    %414 = vmatpush2.msra.mxu0 0.0
    %415 = vmatprep.subr.mxu0 0.0
    %416 = vmatpush2.msra.mxu0 0.0
    %417 = vmatprep.subr.mxu0 0.0
    %418 = vmatpush2.msra.mxu0 0.0
    %419 = vmatprep.subr.mxu0 0.0
    %420 = vmatpush2.msra.mxu0 0.0
    %421 = vmatprep.subr.mxu0 0.0
    %422 = vmatpush2.msra.mxu0 0.0
    %423 = vmatprep.subr.mxu0 0.0
    %424 = vmatpush2.msra.mxu0 0.0
    %425 = vmatprep.subr.mxu0 0.0
    %426 = vmatpush2.msra.mxu0 0.0
    %427 = vmatprep.mubr.f32.mxu0 0.0
    %428 = vmatmul.mubr.f32.gmra.mxu0 %v358
    %v429 = vpop.f32.mrf.mxu0
    %v430 = vadd.f32 0.0, %v429
    %v431 = vpop.f32.mrf.mxu0
    %432 = vmatprep.mubr.f32.mxu0 0.0
    %433 = vmatmul.mubr.f32.gmra.mxu0 %v361
    %v434 = vpop.f32.mrf.mxu0
    %v435 = vadd.f32 0.0, %v434
    %v436 = vpop.f32.mrf.mxu0
    %437 = vdwg.mxu0
    %v438 = vsel %vm356, %v354, 0.0
    %439 = vadd.xlane.f32.xlu0 %v438
    %v440 = vpop.xlane.xlu0 %439
    %v441 = vsel %vm356, %v355, 0.0
    %442 = vadd.xlane.f32.xlu0 %v441
    %v443 = vpop.xlane.xlu0 %442
    %vm444 = vcmp.eq.f32.partialorder %v440, 0.0
    %vm445 = vcmp.eq.f32.partialorder %v443, 0.0
    %v446 = vrcp.pop %v440
    %v447 = vrcp.pop %v443
    %v448 = vsel %vm444, 0.0, %v446
    %v449 = vsel %vm445, 0.0, %v447
    %v450 = vmul.f32 %v430, %v448
    %v451 = vmul.f32 %v435, %v449
    %452 = vst.msk [vmem:[#allocation8] sm:$0xff] %vm90, %v450
    %453 = vst.msk [vmem:[#allocation8 + $0x8] sm:$0xff] %vm90, %v451
    %454 = vrot.lane.b32.xlu0 %v164, 96
    %v455 = vpop.permute.xlu0 %454
    %456 = vrot.lane.b32.xlu0 %v170, 96
    %v457 = vpop.permute.xlu0 %456
    %458 = vrot.lane.b32.xlu0 %v166, 96
    %v459 = vpop.permute.xlu0 %458
    %460 = vrot.lane.b32.xlu0 %v172, 96
    %v461 = vpop.permute.xlu0 %460
    %v462 = vsel %vm90, %v455, 0
    %v464 = vsel %vm90, %v457, 0
    %v466 = vsel %vm90, %v459, 0
    %v468 = vsel %vm90, %v461, 0
    %470 = vmatprep.subr.mxu0 0.0
    %471 = vmatpush1.xpose.msra.mxu0 0.0
    %472 = vmatprep.subr.mxu0 0.0
    %473 = vmatpush1.xpose.msra.mxu0 0.0
    %474 = vmatprep.subr.mxu0 0.0
    %475 = vmatpush1.xpose.msra.mxu0 0.0
    %476 = vmatprep.subr.mxu0 0.0
    %477 = vmatpush1.xpose.msra.mxu0 0.0
    %478 = vmatprep.subr.mxu0 0.0
    %479 = vmatpush1.xpose.msra.mxu0 0.0
    %480 = vmatprep.subr.mxu0 0.0
    %481 = vmatpush1.xpose.msra.mxu0 0.0
    %482 = vmatprep.subr.mxu0 0.0
    %483 = vmatpush1.xpose.msra.mxu0 0.0
    %484 = vmatprep.subr.mxu0 0.0
    %485 = vmatpush1.xpose.msra.mxu0 0.0
    %486 = vmatprep.subr.mxu0 0.0
    %487 = vmatpush1.xpose.msra.mxu0 0.0
    %488 = vmatprep.subr.mxu0 0.0
    %489 = vmatpush1.xpose.msra.mxu0 0.0
    %490 = vmatprep.subr.mxu0 0.0
    %491 = vmatpush1.xpose.msra.mxu0 0.0
    %492 = vmatprep.subr.mxu0 0.0
    %493 = vmatpush1.xpose.msra.mxu0 0.0
    %494 = vmatprep.subr.mxu0 0.0
    %495 = vmatpush1.xpose.msra.mxu0 0.0
    %496 = vmatprep.subr.mxu0 0.0
    %497 = vmatpush1.xpose.msra.mxu0 0.0
    %498 = vmatprep.subr.mxu0 0.0
    %499 = vmatpush1.xpose.msra.mxu0 %v468
    %500 = vmatprep.subr.mxu0 0.0
    %501 = vmatpush1.xpose.msra.mxu0 %v466
    %502 = vmatprep.subr.mxu0 0.0
    %503 = vmatpush2.xpose.msra.mxu0 0.0
    %504 = vmatprep.subr.mxu0 0.0
    %505 = vmatpush2.xpose.msra.mxu0 0.0
    %506 = vmatprep.subr.mxu0 0.0
    %507 = vmatpush2.xpose.msra.mxu0 0.0
    %508 = vmatprep.subr.mxu0 0.0
    %509 = vmatpush2.xpose.msra.mxu0 0.0
    %510 = vmatprep.subr.mxu0 0.0
    %511 = vmatpush2.xpose.msra.mxu0 0.0
    %512 = vmatprep.subr.mxu0 0.0
    %513 = vmatpush2.xpose.msra.mxu0 0.0
    %514 = vmatprep.subr.mxu0 0.0
    %515 = vmatpush2.xpose.msra.mxu0 0.0
    %516 = vmatprep.subr.mxu0 0.0
    %517 = vmatpush2.xpose.msra.mxu0 0.0
    %518 = vmatprep.subr.mxu0 0.0
    %519 = vmatpush2.xpose.msra.mxu0 0.0
    %520 = vmatprep.subr.mxu0 0.0
    %521 = vmatpush2.xpose.msra.mxu0 0.0
    %522 = vmatprep.subr.mxu0 0.0
    %523 = vmatpush2.xpose.msra.mxu0 0.0
    %524 = vmatprep.subr.mxu0 0.0
    %525 = vmatpush2.xpose.msra.mxu0 0.0
    %526 = vmatprep.subr.mxu0 0.0
    %527 = vmatpush2.xpose.msra.mxu0 0.0
    %528 = vmatprep.subr.mxu0 0.0
    %529 = vmatpush2.xpose.msra.mxu0 0.0
    %530 = vmatprep.subr.mxu0 0.0
    %531 = vmatpush2.xpose.msra.mxu0 0.0
    %532 = vmatprep.subr.mxu0 0.0
    %533 = vmatpush2.xpose.msra.mxu0 0.0
    %534 = vmatprep.mubr.f32.mxu0 0.0
    %535 = vmatmul.mubr.f32.gmra.mxu0 %v462
    %v536 = vpop.f32.mrf.mxu0
    %v537 = vadd.f32 0.0, %v536
    %v538 = vpop.f32.mrf.mxu0
    %539 = vmatprep.mubr.f32.mxu0 0.0
    %540 = vmatmul.mubr.f32.gmra.mxu0 %v464
    %v541 = vpop.f32.mrf.mxu0
    %v542 = vadd.f32 0.0, %v541
    %v543 = vpop.f32.mrf.mxu0
    %544 = vdwg.mxu0
    %v545 = vmax.f32 %v537, -5.0
    %v546 = vmax.f32 %v542, -5.0
    %v547 = vmin.f32 %v545, 5.0
    %v548 = vmin.f32 %v546, 5.0
    %v549 = vmul.f32 %v547, 1.442695
    %v550 = vpow.pop %v549
    %v551 = vmul.f32 %v548, 1.442695
    %v552 = vpow.pop %v551
    %v553 = vsel %vm352, %v550, 0.0
    %v554 = vsel %vm353, %v552, 0.0
    %557 = vrot.lane.b32.xlu0 %v241, 96
    %v558 = vpop.permute.xlu0 %557
    %559 = vrot.lane.b32.xlu0 %v246, 96
    %v560 = vpop.permute.xlu0 %559
    %v564 = vsel %vm356, %v553, 0
    %v567 = vsel %vm356, %v554, 0
    %569 = vmatprep.subr.mxu0 0.0
    %570 = vmatpush1.msra.mxu0 0.0
    %571 = vmatprep.subr.mxu0 0.0
    %572 = vmatpush1.msra.mxu0 0.0
    %573 = vmatprep.subr.mxu0 0.0
    %574 = vmatpush1.msra.mxu0 0.0
    %575 = vmatprep.subr.mxu0 0.0
    %576 = vmatpush1.msra.mxu0 0.0
    %577 = vmatprep.subr.mxu0 0.0
    %578 = vmatpush1.msra.mxu0 0.0
    %579 = vmatprep.subr.mxu0 0.0
    %580 = vmatpush1.msra.mxu0 0.0
    %581 = vmatprep.subr.mxu0 0.0
    %582 = vmatpush1.msra.mxu0 0.0
    %583 = vmatprep.subr.mxu0 0.0
    %584 = vmatpush1.msra.mxu0 0.0
    %585 = vmatprep.subr.mxu0 0.0
    %586 = vmatpush1.msra.mxu0 0.0
    %587 = vmatprep.subr.mxu0 0.0
    %588 = vmatpush1.msra.mxu0 0.0
    %589 = vmatprep.subr.mxu0 0.0
    %590 = vmatpush1.msra.mxu0 0.0
    %591 = vmatprep.subr.mxu0 0.0
    %592 = vmatpush1.msra.mxu0 0.0
    %593 = vmatprep.subr.mxu0 0.0
    %594 = vmatpush1.msra.mxu0 0.0
    %595 = vmatprep.subr.mxu0 0.0
    %596 = vmatpush1.msra.mxu0 0.0
    %597 = vmatprep.subr.mxu0 0.0
    %598 = vmatpush1.msra.mxu0 %v560
    %599 = vmatprep.subr.mxu0 0.0
    %600 = vmatpush1.msra.mxu0 %v558
    %601 = vmatprep.subr.mxu0 0.0
    %602 = vmatpush2.msra.mxu0 0.0
    %603 = vmatprep.subr.mxu0 0.0
    %604 = vmatpush2.msra.mxu0 0.0
    %605 = vmatprep.subr.mxu0 0.0
    %606 = vmatpush2.msra.mxu0 0.0
    %607 = vmatprep.subr.mxu0 0.0
    %608 = vmatpush2.msra.mxu0 0.0
    %609 = vmatprep.subr.mxu0 0.0
    %610 = vmatpush2.msra.mxu0 0.0
    %611 = vmatprep.subr.mxu0 0.0
    %612 = vmatpush2.msra.mxu0 0.0
    %613 = vmatprep.subr.mxu0 0.0
    %614 = vmatpush2.msra.mxu0 0.0
    %615 = vmatprep.subr.mxu0 0.0
    %616 = vmatpush2.msra.mxu0 0.0
    %617 = vmatprep.subr.mxu0 0.0
    %618 = vmatpush2.msra.mxu0 0.0
    %619 = vmatprep.subr.mxu0 0.0
    %620 = vmatpush2.msra.mxu0 0.0
    %621 = vmatprep.subr.mxu0 0.0
    %622 = vmatpush2.msra.mxu0 0.0
    %623 = vmatprep.subr.mxu0 0.0
    %624 = vmatpush2.msra.mxu0 0.0
    %625 = vmatprep.subr.mxu0 0.0
    %626 = vmatpush2.msra.mxu0 0.0
    %627 = vmatprep.subr.mxu0 0.0
    %628 = vmatpush2.msra.mxu0 0.0
    %629 = vmatprep.subr.mxu0 0.0
    %630 = vmatpush2.msra.mxu0 0.0
    %631 = vmatprep.subr.mxu0 0.0
    %632 = vmatpush2.msra.mxu0 0.0
    %633 = vmatprep.mubr.f32.mxu0 0.0
    %634 = vmatmul.mubr.f32.gmra.mxu0 %v564
    %v635 = vpop.f32.mrf.mxu0
    %v636 = vadd.f32 0.0, %v635
    %v637 = vpop.f32.mrf.mxu0
    %638 = vmatprep.mubr.f32.mxu0 0.0
    %639 = vmatmul.mubr.f32.gmra.mxu0 %v567
    %v640 = vpop.f32.mrf.mxu0
    %v641 = vadd.f32 0.0, %v640
    %v642 = vpop.f32.mrf.mxu0
    %643 = vdwg.mxu0
    %v644 = vsel %vm356, %v553, 0.0
    %645 = vadd.xlane.f32.xlu0 %v644
    %v646 = vpop.xlane.xlu0 %645
    %v647 = vsel %vm356, %v554, 0.0
    %648 = vadd.xlane.f32.xlu0 %v647
    %v649 = vpop.xlane.xlu0 %648
    %vm650 = vcmp.eq.f32.partialorder %v646, 0.0
    %vm651 = vcmp.eq.f32.partialorder %v649, 0.0
    %v652 = vrcp.pop %v646
    %v653 = vrcp.pop %v649
    %v654 = vsel %vm650, 0.0, %v652
    %v655 = vsel %vm651, 0.0, %v653
    %v656 = vmul.f32 %v636, %v654
    %v657 = vmul.f32 %v641, %v655
    %660 = vrot.lane.b32.xlu0 %v656, 32
    %v661 = vpop.permute.xlu0 %660
    %662 = vrot.lane.b32.xlu0 %v657, 32
    %v663 = vpop.permute.xlu0 %662
    %vm666 = vcmask 523520
    %667 = vst.msk [vmem:[#allocation8] sm:$0xff] %vm666, %v661
    %668 = vst.msk [vmem:[#allocation8 + $0x8] sm:$0xff] %vm666, %v663
    %669 = vrot.lane.b32.xlu0 %v164, 64
    %v670 = vpop.permute.xlu0 %669
    %671 = vrot.lane.b32.xlu0 %v170, 64
    %v672 = vpop.permute.xlu0 %671
    %673 = vrot.lane.b32.xlu0 %v166, 64
    %v674 = vpop.permute.xlu0 %673
    %675 = vrot.lane.b32.xlu0 %v172, 64
    %v676 = vpop.permute.xlu0 %675
    %v677 = vsel %vm90, %v670, 0
    %v679 = vsel %vm90, %v672, 0
    %v681 = vsel %vm90, %v674, 0
    %v683 = vsel %vm90, %v676, 0
    %685 = vmatprep.subr.mxu0 0.0
    %686 = vmatpush1.xpose.msra.mxu0 0.0
    %687 = vmatprep.subr.mxu0 0.0
    %688 = vmatpush1.xpose.msra.mxu0 0.0
    %689 = vmatprep.subr.mxu0 0.0
    %690 = vmatpush1.xpose.msra.mxu0 0.0
    %691 = vmatprep.subr.mxu0 0.0
    %692 = vmatpush1.xpose.msra.mxu0 0.0
    %693 = vmatprep.subr.mxu0 0.0
    %694 = vmatpush1.xpose.msra.mxu0 0.0
    %695 = vmatprep.subr.mxu0 0.0
    %696 = vmatpush1.xpose.msra.mxu0 0.0
    %697 = vmatprep.subr.mxu0 0.0
    %698 = vmatpush1.xpose.msra.mxu0 0.0
    %699 = vmatprep.subr.mxu0 0.0
    %700 = vmatpush1.xpose.msra.mxu0 0.0
    %701 = vmatprep.subr.mxu0 0.0
    %702 = vmatpush1.xpose.msra.mxu0 0.0
    %703 = vmatprep.subr.mxu0 0.0
    %704 = vmatpush1.xpose.msra.mxu0 0.0
    %705 = vmatprep.subr.mxu0 0.0
    %706 = vmatpush1.xpose.msra.mxu0 0.0
    %707 = vmatprep.subr.mxu0 0.0
    %708 = vmatpush1.xpose.msra.mxu0 0.0
    %709 = vmatprep.subr.mxu0 0.0
    %710 = vmatpush1.xpose.msra.mxu0 0.0
    %711 = vmatprep.subr.mxu0 0.0
    %712 = vmatpush1.xpose.msra.mxu0 0.0
    %713 = vmatprep.subr.mxu0 0.0
    %714 = vmatpush1.xpose.msra.mxu0 %v683
    %715 = vmatprep.subr.mxu0 0.0
    %716 = vmatpush1.xpose.msra.mxu0 %v681
    %717 = vmatprep.subr.mxu0 0.0
    %718 = vmatpush2.xpose.msra.mxu0 0.0
    %719 = vmatprep.subr.mxu0 0.0
    %720 = vmatpush2.xpose.msra.mxu0 0.0
    %721 = vmatprep.subr.mxu0 0.0
    %722 = vmatpush2.xpose.msra.mxu0 0.0
    %723 = vmatprep.subr.mxu0 0.0
    %724 = vmatpush2.xpose.msra.mxu0 0.0
    %725 = vmatprep.subr.mxu0 0.0
    %726 = vmatpush2.xpose.msra.mxu0 0.0
    %727 = vmatprep.subr.mxu0 0.0
    %728 = vmatpush2.xpose.msra.mxu0 0.0
    %729 = vmatprep.subr.mxu0 0.0
    %730 = vmatpush2.xpose.msra.mxu0 0.0
    %731 = vmatprep.subr.mxu0 0.0
    %732 = vmatpush2.xpose.msra.mxu0 0.0
    %733 = vmatprep.subr.mxu0 0.0
    %734 = vmatpush2.xpose.msra.mxu0 0.0
    %735 = vmatprep.subr.mxu0 0.0
    %736 = vmatpush2.xpose.msra.mxu0 0.0
    %737 = vmatprep.subr.mxu0 0.0
    %738 = vmatpush2.xpose.msra.mxu0 0.0
    %739 = vmatprep.subr.mxu0 0.0
    %740 = vmatpush2.xpose.msra.mxu0 0.0
    %741 = vmatprep.subr.mxu0 0.0
    %742 = vmatpush2.xpose.msra.mxu0 0.0
    %743 = vmatprep.subr.mxu0 0.0
    %744 = vmatpush2.xpose.msra.mxu0 0.0
    %745 = vmatprep.subr.mxu0 0.0
    %746 = vmatpush2.xpose.msra.mxu0 0.0
    %747 = vmatprep.subr.mxu0 0.0
    %748 = vmatpush2.xpose.msra.mxu0 0.0
    %749 = vmatprep.mubr.f32.mxu0 0.0
    %750 = vmatmul.mubr.f32.gmra.mxu0 %v677
    %v751 = vpop.f32.mrf.mxu0
    %v752 = vadd.f32 0.0, %v751
    %v753 = vpop.f32.mrf.mxu0
    %754 = vmatprep.mubr.f32.mxu0 0.0
    %755 = vmatmul.mubr.f32.gmra.mxu0 %v679
    %v756 = vpop.f32.mrf.mxu0
    %v757 = vadd.f32 0.0, %v756
    %v758 = vpop.f32.mrf.mxu0
    %759 = vdwg.mxu0
    %v760 = vmax.f32 %v752, -5.0
    %v761 = vmax.f32 %v757, -5.0
    %v762 = vmin.f32 %v760, 5.0
    %v763 = vmin.f32 %v761, 5.0
    %v764 = vmul.f32 %v762, 1.442695
    %v765 = vpow.pop %v764
    %v766 = vmul.f32 %v763, 1.442695
    %v767 = vpow.pop %v766
    %v768 = vsel %vm352, %v765, 0.0
    %v769 = vsel %vm353, %v767, 0.0
    %770 = vrot.lane.b32.xlu0 %v241, 64
    %v771 = vpop.permute.xlu0 %770
    %772 = vrot.lane.b32.xlu0 %v246, 64
    %v773 = vpop.permute.xlu0 %772
    %v777 = vsel %vm356, %v768, 0
    %v780 = vsel %vm356, %v769, 0
    %782 = vmatprep.subr.mxu0 0.0
    %783 = vmatpush1.msra.mxu0 0.0
    %784 = vmatprep.subr.mxu0 0.0
    %785 = vmatpush1.msra.mxu0 0.0
    %786 = vmatprep.subr.mxu0 0.0
    %787 = vmatpush1.msra.mxu0 0.0
    %788 = vmatprep.subr.mxu0 0.0
    %789 = vmatpush1.msra.mxu0 0.0
    %790 = vmatprep.subr.mxu0 0.0
    %791 = vmatpush1.msra.mxu0 0.0
    %792 = vmatprep.subr.mxu0 0.0
    %793 = vmatpush1.msra.mxu0 0.0
    %794 = vmatprep.subr.mxu0 0.0
    %795 = vmatpush1.msra.mxu0 0.0
    %796 = vmatprep.subr.mxu0 0.0
    %797 = vmatpush1.msra.mxu0 0.0
    %798 = vmatprep.subr.mxu0 0.0
    %799 = vmatpush1.msra.mxu0 0.0
    %800 = vmatprep.subr.mxu0 0.0
    %801 = vmatpush1.msra.mxu0 0.0
    %802 = vmatprep.subr.mxu0 0.0
    %803 = vmatpush1.msra.mxu0 0.0
    %804 = vmatprep.subr.mxu0 0.0
    %805 = vmatpush1.msra.mxu0 0.0
    %806 = vmatprep.subr.mxu0 0.0
    %807 = vmatpush1.msra.mxu0 0.0
    %808 = vmatprep.subr.mxu0 0.0
    %809 = vmatpush1.msra.mxu0 0.0
    %810 = vmatprep.subr.mxu0 0.0
    %811 = vmatpush1.msra.mxu0 %v773
    %812 = vmatprep.subr.mxu0 0.0
    %813 = vmatpush1.msra.mxu0 %v771
    %814 = vmatprep.subr.mxu0 0.0
    %815 = vmatpush2.msra.mxu0 0.0
    %816 = vmatprep.subr.mxu0 0.0
    %817 = vmatpush2.msra.mxu0 0.0
    %818 = vmatprep.subr.mxu0 0.0
    %819 = vmatpush2.msra.mxu0 0.0
    %820 = vmatprep.subr.mxu0 0.0
    %821 = vmatpush2.msra.mxu0 0.0
    %822 = vmatprep.subr.mxu0 0.0
    %823 = vmatpush2.msra.mxu0 0.0
    %824 = vmatprep.subr.mxu0 0.0
    %825 = vmatpush2.msra.mxu0 0.0
    %826 = vmatprep.subr.mxu0 0.0
    %827 = vmatpush2.msra.mxu0 0.0
    %828 = vmatprep.subr.mxu0 0.0
    %829 = vmatpush2.msra.mxu0 0.0
    %830 = vmatprep.subr.mxu0 0.0
    %831 = vmatpush2.msra.mxu0 0.0
    %832 = vmatprep.subr.mxu0 0.0
    %833 = vmatpush2.msra.mxu0 0.0
    %834 = vmatprep.subr.mxu0 0.0
    %835 = vmatpush2.msra.mxu0 0.0
    %836 = vmatprep.subr.mxu0 0.0
    %837 = vmatpush2.msra.mxu0 0.0
    %838 = vmatprep.subr.mxu0 0.0
    %839 = vmatpush2.msra.mxu0 0.0
    %840 = vmatprep.subr.mxu0 0.0
    %841 = vmatpush2.msra.mxu0 0.0
    %842 = vmatprep.subr.mxu0 0.0
    %843 = vmatpush2.msra.mxu0 0.0
    %844 = vmatprep.subr.mxu0 0.0
    %845 = vmatpush2.msra.mxu0 0.0
    %846 = vmatprep.mubr.f32.mxu0 0.0
    %847 = vmatmul.mubr.f32.gmra.mxu0 %v777
    %v848 = vpop.f32.mrf.mxu0
    %v849 = vadd.f32 0.0, %v848
    %v850 = vpop.f32.mrf.mxu0
    %851 = vmatprep.mubr.f32.mxu0 0.0
    %852 = vmatmul.mubr.f32.gmra.mxu0 %v780
    %v853 = vpop.f32.mrf.mxu0
    %v854 = vadd.f32 0.0, %v853
    %v855 = vpop.f32.mrf.mxu0
    %856 = vdwg.mxu0
    %v857 = vsel %vm356, %v768, 0.0
    %858 = vadd.xlane.f32.xlu0 %v857
    %v859 = vpop.xlane.xlu0 %858
    %v860 = vsel %vm356, %v769, 0.0
    %861 = vadd.xlane.f32.xlu0 %v860
    %v862 = vpop.xlane.xlu0 %861
    %vm863 = vcmp.eq.f32.partialorder %v859, 0.0
    %vm864 = vcmp.eq.f32.partialorder %v862, 0.0
    %v865 = vrcp.pop %v859
    %v866 = vrcp.pop %v862
    %v867 = vsel %vm863, 0.0, %v865
    %v868 = vsel %vm864, 0.0, %v866
    %v869 = vmul.f32 %v849, %v867
    %v870 = vmul.f32 %v854, %v868
    %873 = vrot.lane.b32.xlu0 %v869, 64
    %v874 = vpop.permute.xlu0 %873
    %875 = vrot.lane.b32.xlu0 %v870, 64
    %v876 = vpop.permute.xlu0 %875
    %vm879 = vcmask 785920
    %880 = vst.msk [vmem:[#allocation8] sm:$0xff] %vm879, %v874
    %881 = vst.msk [vmem:[#allocation8 + $0x8] sm:$0xff] %vm879, %v876
    %882 = vrot.lane.b32.xlu0 %v164, 32
    %v883 = vpop.permute.xlu0 %882
    %884 = vrot.lane.b32.xlu0 %v170, 32
    %v885 = vpop.permute.xlu0 %884
    %886 = vrot.lane.b32.xlu0 %v166, 32
    %v887 = vpop.permute.xlu0 %886
    %888 = vrot.lane.b32.xlu0 %v172, 32
    %v889 = vpop.permute.xlu0 %888
    %v890 = vsel %vm90, %v883, 0
    %v892 = vsel %vm90, %v885, 0
    %v894 = vsel %vm90, %v887, 0
    %v896 = vsel %vm90, %v889, 0
    %898 = vmatprep.subr.mxu0 0.0
    %899 = vmatpush1.xpose.msra.mxu0 0.0
    %900 = vmatprep.subr.mxu0 0.0
    %901 = vmatpush1.xpose.msra.mxu0 0.0
    %902 = vmatprep.subr.mxu0 0.0
    %903 = vmatpush1.xpose.msra.mxu0 0.0
    %904 = vmatprep.subr.mxu0 0.0
    %905 = vmatpush1.xpose.msra.mxu0 0.0
    %906 = vmatprep.subr.mxu0 0.0
    %907 = vmatpush1.xpose.msra.mxu0 0.0
    %908 = vmatprep.subr.mxu0 0.0
    %909 = vmatpush1.xpose.msra.mxu0 0.0
    %910 = vmatprep.subr.mxu0 0.0
    %911 = vmatpush1.xpose.msra.mxu0 0.0
    %912 = vmatprep.subr.mxu0 0.0
    %913 = vmatpush1.xpose.msra.mxu0 0.0
    %914 = vmatprep.subr.mxu0 0.0
    %915 = vmatpush1.xpose.msra.mxu0 0.0
    %916 = vmatprep.subr.mxu0 0.0
    %917 = vmatpush1.xpose.msra.mxu0 0.0
    %918 = vmatprep.subr.mxu0 0.0
    %919 = vmatpush1.xpose.msra.mxu0 0.0
    %920 = vmatprep.subr.mxu0 0.0
    %921 = vmatpush1.xpose.msra.mxu0 0.0
    %922 = vmatprep.subr.mxu0 0.0
    %923 = vmatpush1.xpose.msra.mxu0 0.0
    %924 = vmatprep.subr.mxu0 0.0
    %925 = vmatpush1.xpose.msra.mxu0 0.0
    %926 = vmatprep.subr.mxu0 0.0
    %927 = vmatpush1.xpose.msra.mxu0 %v896
    %928 = vmatprep.subr.mxu0 0.0
    %929 = vmatpush1.xpose.msra.mxu0 %v894
    %930 = vmatprep.subr.mxu0 0.0
    %931 = vmatpush2.xpose.msra.mxu0 0.0
    %932 = vmatprep.subr.mxu0 0.0
    %933 = vmatpush2.xpose.msra.mxu0 0.0
    %934 = vmatprep.subr.mxu0 0.0
    %935 = vmatpush2.xpose.msra.mxu0 0.0
    %936 = vmatprep.subr.mxu0 0.0
    %937 = vmatpush2.xpose.msra.mxu0 0.0
    %938 = vmatprep.subr.mxu0 0.0
    %939 = vmatpush2.xpose.msra.mxu0 0.0
    %940 = vmatprep.subr.mxu0 0.0
    %941 = vmatpush2.xpose.msra.mxu0 0.0
    %942 = vmatprep.subr.mxu0 0.0
    %943 = vmatpush2.xpose.msra.mxu0 0.0
    %944 = vmatprep.subr.mxu0 0.0
    %945 = vmatpush2.xpose.msra.mxu0 0.0
    %946 = vmatprep.subr.mxu0 0.0
    %947 = vmatpush2.xpose.msra.mxu0 0.0
    %948 = vmatprep.subr.mxu0 0.0
    %949 = vmatpush2.xpose.msra.mxu0 0.0
    %950 = vmatprep.subr.mxu0 0.0
    %951 = vmatpush2.xpose.msra.mxu0 0.0
    %952 = vmatprep.subr.mxu0 0.0
    %953 = vmatpush2.xpose.msra.mxu0 0.0
    %954 = vmatprep.subr.mxu0 0.0
    %955 = vmatpush2.xpose.msra.mxu0 0.0
    %956 = vmatprep.subr.mxu0 0.0
    %957 = vmatpush2.xpose.msra.mxu0 0.0
    %958 = vmatprep.subr.mxu0 0.0
    %959 = vmatpush2.xpose.msra.mxu0 0.0
    %960 = vmatprep.subr.mxu0 0.0
    %961 = vmatpush2.xpose.msra.mxu0 0.0
    %962 = vmatprep.mubr.f32.mxu0 0.0
    %963 = vmatmul.mubr.f32.gmra.mxu0 %v890
    %v964 = vpop.f32.mrf.mxu0
    %v965 = vadd.f32 0.0, %v964
    %v966 = vpop.f32.mrf.mxu0
    %967 = vmatprep.mubr.f32.mxu0 0.0
    %968 = vmatmul.mubr.f32.gmra.mxu0 %v892
    %v969 = vpop.f32.mrf.mxu0
    %v970 = vadd.f32 0.0, %v969
    %v971 = vpop.f32.mrf.mxu0
    %972 = vdwg.mxu0
    %v973 = vmax.f32 %v965, -5.0
    %v974 = vmax.f32 %v970, -5.0
    %v975 = vmin.f32 %v973, 5.0
    %v976 = vmin.f32 %v974, 5.0
    %v977 = vmul.f32 %v975, 1.442695
    %v978 = vpow.pop %v977
    %v979 = vmul.f32 %v976, 1.442695
    %v980 = vpow.pop %v979
    %v981 = vsel %vm352, %v978, 0.0
    %v982 = vsel %vm353, %v980, 0.0
    %983 = vrot.lane.b32.xlu0 %v241, 32
    %v984 = vpop.permute.xlu0 %983
    %985 = vrot.lane.b32.xlu0 %v246, 32
    %v986 = vpop.permute.xlu0 %985
    %v990 = vsel %vm356, %v981, 0
    %v993 = vsel %vm356, %v982, 0
    %995 = vmatprep.subr.mxu0 0.0
    %996 = vmatpush1.msra.mxu0 0.0
    %997 = vmatprep.subr.mxu0 0.0
    %998 = vmatpush1.msra.mxu0 0.0
    %999 = vmatprep.subr.mxu0 0.0
    %1000 = vmatpush1.msra.mxu0 0.0
    %1001 = vmatprep.subr.mxu0 0.0
    %1002 = vmatpush1.msra.mxu0 0.0
    %1003 = vmatprep.subr.mxu0 0.0
    %1004 = vmatpush1.msra.mxu0 0.0
    %1005 = vmatprep.subr.mxu0 0.0
    %1006 = vmatpush1.msra.mxu0 0.0
    %1007 = vmatprep.subr.mxu0 0.0
    %1008 = vmatpush1.msra.mxu0 0.0
    %1009 = vmatprep.subr.mxu0 0.0
    %1010 = vmatpush1.msra.mxu0 0.0
    %1011 = vmatprep.subr.mxu0 0.0
    %1012 = vmatpush1.msra.mxu0 0.0
    %1013 = vmatprep.subr.mxu0 0.0
    %1014 = vmatpush1.msra.mxu0 0.0
    %1015 = vmatprep.subr.mxu0 0.0
    %1016 = vmatpush1.msra.mxu0 0.0
    %1017 = vmatprep.subr.mxu0 0.0
    %1018 = vmatpush1.msra.mxu0 0.0
    %1019 = vmatprep.subr.mxu0 0.0
    %1020 = vmatpush1.msra.mxu0 0.0
    %1021 = vmatprep.subr.mxu0 0.0
    %1022 = vmatpush1.msra.mxu0 0.0
    %1023 = vmatprep.subr.mxu0 0.0
    %1024 = vmatpush1.msra.mxu0 %v986
    %1025 = vmatprep.subr.mxu0 0.0
    %1026 = vmatpush1.msra.mxu0 %v984
    %1027 = vmatprep.subr.mxu0 0.0
    %1028 = vmatpush2.msra.mxu0 0.0
    %1029 = vmatprep.subr.mxu0 0.0
    %1030 = vmatpush2.msra.mxu0 0.0
    %1031 = vmatprep.subr.mxu0 0.0
    %1032 = vmatpush2.msra.mxu0 0.0
    %1033 = vmatprep.subr.mxu0 0.0
    %1034 = vmatpush2.msra.mxu0 0.0
    %1035 = vmatprep.subr.mxu0 0.0
    %1036 = vmatpush2.msra.mxu0 0.0
    %1037 = vmatprep.subr.mxu0 0.0
    %1038 = vmatpush2.msra.mxu0 0.0
    %1039 = vmatprep.subr.mxu0 0.0
    %1040 = vmatpush2.msra.mxu0 0.0
    %1041 = vmatprep.subr.mxu0 0.0
    %1042 = vmatpush2.msra.mxu0 0.0
    %1043 = vmatprep.subr.mxu0 0.0
    %1044 = vmatpush2.msra.mxu0 0.0
    %1045 = vmatprep.subr.mxu0 0.0
    %1046 = vmatpush2.msra.mxu0 0.0
    %1047 = vmatprep.subr.mxu0 0.0
    %1048 = vmatpush2.msra.mxu0 0.0
    %1049 = vmatprep.subr.mxu0 0.0
    %1050 = vmatpush2.msra.mxu0 0.0
    %1051 = vmatprep.subr.mxu0 0.0
    %1052 = vmatpush2.msra.mxu0 0.0
    %1053 = vmatprep.subr.mxu0 0.0
    %1054 = vmatpush2.msra.mxu0 0.0
    %1055 = vmatprep.subr.mxu0 0.0
    %1056 = vmatpush2.msra.mxu0 0.0
    %1057 = vmatprep.subr.mxu0 0.0
    %1058 = vmatpush2.msra.mxu0 0.0
    %1059 = vmatprep.mubr.f32.mxu0 0.0
    %1060 = vmatmul.mubr.f32.gmra.mxu0 %v990
    %v1061 = vpop.f32.mrf.mxu0
    %v1062 = vadd.f32 0.0, %v1061
    %v1063 = vpop.f32.mrf.mxu0
    %1064 = vmatprep.mubr.f32.mxu0 0.0
    %1065 = vmatmul.mubr.f32.gmra.mxu0 %v993
    %v1066 = vpop.f32.mrf.mxu0
    %v1067 = vadd.f32 0.0, %v1066
    %v1068 = vpop.f32.mrf.mxu0
    %1069 = vdwg.mxu0
    %v1070 = vsel %vm356, %v981, 0.0
    %1071 = vadd.xlane.f32.xlu0 %v1070
    %v1072 = vpop.xlane.xlu0 %1071
    %v1073 = vsel %vm356, %v982, 0.0
    %1074 = vadd.xlane.f32.xlu0 %v1073
    %v1075 = vpop.xlane.xlu0 %1074
    %vm1076 = vcmp.eq.f32.partialorder %v1072, 0.0
    %vm1077 = vcmp.eq.f32.partialorder %v1075, 0.0
    %v1078 = vrcp.pop %v1072
    %v1079 = vrcp.pop %v1075
    %v1080 = vsel %vm1076, 0.0, %v1078
    %v1081 = vsel %vm1077, 0.0, %v1079
    %v1082 = vmul.f32 %v1062, %v1080
    %v1083 = vmul.f32 %v1067, %v1081
    %1086 = vrot.lane.b32.xlu0 %v1082, 96
    %v1087 = vpop.permute.xlu0 %1086
    %1088 = vrot.lane.b32.xlu0 %v1083, 96
    %v1089 = vpop.permute.xlu0 %1088
    %vm1092 = vcmask 1048320
    %1093 = vst.msk [vmem:[#allocation8] sm:$0xff] %vm1092, %v1087
    %1094 = vst.msk [vmem:[#allocation8 + $0x8] sm:$0xff] %vm1092, %v1089
    // Predicated region
    $region30: #{tpu_custom_call.1} parent=1 // pred_check
      _
    $region31: #{tpu_custom_call.1} parent=1 // pred_check_branch
      %1096 = sbr.rel (0) target = $region33
    $region32: #{tpu_custom_call.1} parent=1 // pred_region
      %s1098 = ssub.s32 256, 256
      %1099 = vsyncadd [#allocation4], %s1098
      %s1100 = sshll.u32 [#allocation8], 4
      %s1101 = int_to_ptr.vmem [resolvable:$true] %s1100
      %1106 = dma.vmem_to_hbm [thread:$0]  %s1101, 256, %s4, [#allocation4], 128, 128, 8
    $region33: #{tpu_custom_call.1} parent=1 // pred_fallthru
      _
    // Predicated region
    $region34: #{tpu_custom_call.1} parent=1 // pred_check
      _
    $region35: #{tpu_custom_call.1} parent=1 // pred_check_branch
      %1108 = sbr.rel (0) target = $region37
    $region36: #{tpu_custom_call.1} parent=1 // pred_region
      %1109 = dma.done [#allocation4], 256
    $region37: #{tpu_custom_call.1} parent=1 // pred_fallthru
      _
    %1110 = vsyncpa [#allocation3], 1
    %1111 = vsyncpa [#allocation6], 1
    %1112 = vsyncpa [#allocation4], 1

</llo_original>
